<compile_context>
chip_gen: v5e
topology: v5e:2x2
jax: 0.10.0
libtpu: 0.0.40
codegen_flags: <defaults>
</compile_context>

<pallas_src>
import functools

import jax
import jax.numpy as jnp
from jax import lax
from jax.experimental import pallas as pl
from jax.experimental.pallas import tpu as pltpu


def _round_up(n, m):
    return ((n + m - 1) // m) * m


def _fused_linear_kernel(x_ref, w_ref, b_ref, o_ref, *, apply_sigmoid):
    # x_ref: [TM, K], w_ref: [K, N] (resident), b_ref: [1, N], o_ref: [TM, N]
    z = jnp.dot(
        x_ref[...],
        w_ref[...],
        preferred_element_type=jnp.float32,
        precision=lax.Precision.HIGHEST,   # true-f32 accuracy; mem-bound kernel
    )
    z = z + b_ref[...]                     # bias broadcast over batch rows
    if apply_sigmoid:
        o_ref[...] = jax.nn.sigmoid(z).astype(o_ref.dtype)
    else:
        # predict(): sigmoid(z) >= 0.5  <=>  z >= 0 (skips the transcendental).
        # Can only disagree with a sigmoid-first float reference for |z| within
        # ~1 ulp of 0 — never for real data.
        o_ref[...] = (z >= 0.0).astype(o_ref.dtype)


def _pick_tm(rows, per_row_2buf_bytes):
    """Batch-tile (rows of the matrix actually fed to the kernel)."""
    if rows <= 32:
        # Tiny inputs: one exact block (full-dim escape of the (8,128) rule);
        # launch-overhead-bound anyway.
        return rows
    rows8 = _round_up(rows, 8)
    # Keep the per-step working set (x tile + out tile, double-buffered each)
    # around <=8 MiB: well inside every generation's scoped-VMEM default
    # (v5e 16 MiB, v6e/v7x 32 MiB), yet big enough to amortize the ~0.35 us
    # per-grid-step overhead at ~HBM roofline.
    vmem_budget = 8 * 1024 * 1024
    cap = max(8, min(4096, (vmem_budget // max(per_row_2buf_bytes, 1)) // 8 * 8))
    if rows8 <= cap:
        # >= ~4 grid steps so the 'parallel' batch axis lands on both v7x TCs.
        return max(8, _round_up(-(-rows8 // 4), 8))
    return cap


def _run(x, w1, b1, *, apply_sigmoid, out_dtype, tm=None):
    B, D = x.shape
    H1 = w1.shape[0]
    f32 = jnp.float32
    x = x.astype(f32)
    w1 = w1.astype(f32)
    b1 = b1.astype(f32)

    # Lane-dense packing: fold p = 128 // H1 batch rows into one 128-lane row
    # (byte-identical layout), so stores are unmasked full-vreg vst instead of
    # masked 16/128-lane partial stores.  All layout work happens in the
    # wrapper; the kernel stays a plain dot + bias + activation.
    pack = (
        H1 <= 128
        and 128 % H1 == 0
        and B % (128 // H1) == 0
        and (128 // H1) * D <= 2048        # keep kron weight / K dim modest
    )
    if pack:
        p = 128 // H1
        rows, K, N = B // p, p * D, p * H1
        x_fed = x.reshape(rows, K)                       # free row-major view
        w_fed = jnp.kron(jnp.eye(p, dtype=f32), w1.T)    # (p*D, 128) block-diag
        b_fed = jnp.tile(b1, p).reshape(1, N)
    else:
        rows, K, N = B, D, H1
        x_fed = x
        w_fed = w1.T                                     # one-time transpose
        b_fed = b1.reshape(1, N)

    if tm is None:
        per_row_2buf_bytes = 2 * 4 * (_round_up(K, 128) + _round_up(N, 128))
        tm = _pick_tm(rows, per_row_2buf_bytes)
    grid = (pl.cdiv(rows, tm),)

    kernel = functools.partial(_fused_linear_kernel, apply_sigmoid=apply_sigmoid)

    out = pl.pallas_call(
        kernel,
        out_shape=jax.ShapeDtypeStruct((rows, N), out_dtype),
        grid=grid,
        in_specs=[
            pl.BlockSpec((tm, K), lambda i: (i, 0)),     # x: tiled over batch
            pl.BlockSpec((K, N), lambda i: (0, 0)),      # W: VMEM-resident
            pl.BlockSpec((1, N), lambda i: (0, 0)),      # b: VMEM-resident
        ],
        out_specs=pl.BlockSpec((tm, N), lambda i: (i, 0)),
        compiler_params=pltpu.CompilerParams(
            dimension_semantics=("parallel",),           # batch across TCs (v7x)
            vmem_limit_bytes=32 * 1024 * 1024,           # explicit headroom
        ),
        cost_estimate=pl.CostEstimate(
            flops=2 * rows * K * N,
            transcendentals=(B * H1) if apply_sigmoid else 0,
            bytes_accessed=4 * (rows * K + K * N + N)
            + rows * N * jnp.dtype(out_dtype).itemsize,
        ),
    )(x_fed, w_fed, b_fed)

    return out.reshape(B, H1)


@functools.partial(jax.jit, static_argnames=("tm",))
def model_forward(x, w1, b1, tm=None):
    """Model.forward: sigmoid(x @ W1^T + b1)  (linear2/linear3 are unused)."""
    return _run(x, w1, b1, apply_sigmoid=True, out_dtype=jnp.float32, tm=tm)


@functools.partial(jax.jit, static_argnames=("tm",))
def predict(x, w1, b1, tm=None):
    """Class labels, fused in-kernel threshold; int8 to shrink HBM writeback."""
    return _run(x, w1, b1, apply_sigmoid=False, out_dtype=jnp.int8, tm=tm)


if __name__ == "__main__":
    # Small shapes consistent with the module: input_size=32, H1=16
    # (H2 / output_size never used in forward).
    B, input_size, H1 = 8, 32, 16

    key = jax.random.PRNGKey(0)
    kx, kw, kb = jax.random.split(key, 3)

    x = jax.random.normal(kx, (B, input_size), dtype=jnp.float32)
    # Deterministic init mimicking nn.Linear default (uniform +-1/sqrt(fan_in)).
    bound = 1.0 / jnp.sqrt(jnp.float32(input_size))
    w1 = jax.random.uniform(kw, (H1, input_size), dtype=jnp.float32,
                            minval=-bound, maxval=bound)
    b1 = jax.random.uniform(kb, (H1,), dtype=jnp.float32,
                            minval=-bound, maxval=bound)

    out = model_forward(x, w1, b1)
    lbl = predict(x, w1, b1)
    jax.block_until_ready((out, lbl))

    # Plain-JAX reference at matching (true-f32) precision.
    ref = jax.nn.sigmoid(jnp.dot(x, w1.T, precision=lax.Precision.HIGHEST) + b1)
    assert out.shape == (B, H1)
    assert jnp.allclose(out, ref, atol=1e-5, rtol=1e-5)
    assert lbl.shape == (B, H1)
    assert jnp.array_equal(lbl.astype(jnp.int32), (ref >= 0.5).astype(jnp.int32))

    print("KERNEL_OK")
</pallas_src>

<mosaic_0001>
module attributes {stable_mosaic.version = 11 : i64} {
  func.func @_fused_linear_kernel(%arg0: i32, %arg1: memref<1x256xf32, #tpu.memory_space<vmem>>, %arg2: memref<256x128xf32, #tpu.memory_space<vmem>>, %arg3: memref<1x128xf32, #tpu.memory_space<vmem>>, %arg4: memref<1x128xf32, #tpu.memory_space<vmem>>) attributes {dimension_semantics = [#tpu.dimension_semantics<parallel>], iteration_bounds = array<i64: 1>, scalar_prefetch = 0 : i64, scratch_operands = 0 : i64, tpu.core_type = #tpu.core_type<tc>, window_params = [{transform_indices = @transform_0, window_bounds = array<i64: 1, 256>}, {pipeline_mode = #tpu.pipeline_mode<synchronous>, transform_indices = @transform_1, window_bounds = array<i64: 256, 128>}, {pipeline_mode = #tpu.pipeline_mode<synchronous>, transform_indices = @transform_2, window_bounds = array<i64: 1, 128>}, {transform_indices = @transform_3, window_bounds = array<i64: 1, 128>}]} {
    %c0 = arith.constant 0 : index
    %c0_0 = arith.constant 0 : index
    %0 = vector.load %arg1[%c0, %c0_0] : memref<1x256xf32, #tpu.memory_space<vmem>>, vector<1x256xf32>
    %c0_1 = arith.constant 0 : index
    %c0_2 = arith.constant 0 : index
    %1 = vector.load %arg2[%c0_1, %c0_2] : memref<256x128xf32, #tpu.memory_space<vmem>>, vector<256x128xf32>
    %cst = arith.constant dense<0.000000e+00> : vector<1x128xf32>
    %2 = tpu.matmul %0, %1, %cst {dimension_numbers = #tpu.dot_dimension_numbers<[1], [0], [0], [1], [0, 0, 1, 1], [], []>, precision = #tpu.contract_precision<fp32>} : vector<1x256xf32>, vector<256x128xf32>, vector<1x128xf32> -> vector<1x128xf32>
    %c0_3 = arith.constant 0 : index
    %c0_4 = arith.constant 0 : index
    %3 = vector.load %arg3[%c0_3, %c0_4] : memref<1x128xf32, #tpu.memory_space<vmem>>, vector<1x128xf32>
    %4 = arith.addf %2, %3 : vector<1x128xf32>
    %5 = arith.negf %4 : vector<1x128xf32>
    %6 = math.exp %5 : vector<1x128xf32>
    %cst_5 = arith.constant 1.000000e+00 : f32
    %7 = vector.broadcast %cst_5 : f32 to vector<1x128xf32>
    %8 = arith.addf %7, %6 : vector<1x128xf32>
    %9 = arith.divf %7, %8 : vector<1x128xf32>
    %c0_6 = arith.constant 0 : index
    %c0_7 = arith.constant 0 : index
    %10 = vector.load %arg4[%c0_6, %c0_7] : memref<1x128xf32, #tpu.memory_space<vmem>>, vector<1x128xf32>
    tpu.vector_store %arg4[%c0_6, %c0_7], %9 {strides = array<i32>} : memref<1x128xf32, #tpu.memory_space<vmem>>, vector<1x128xf32>,
    return
  }
  func.func @transform_0(%arg0: i32) -> (i32, i32) {
    %c0_i32 = arith.constant 0 : i32
    %c0_i32_0 = arith.constant 0 : i32
    return %arg0, %c0_i32 : i32, i32
  }
  func.func @transform_1(%arg0: i32) -> (i32, i32) {
    %c0_i32 = arith.constant 0 : i32
    %c0_i32_0 = arith.constant 0 : i32
    %c0_i32_1 = arith.constant 0 : i32
    return %c0_i32, %c0_i32_0 : i32, i32
  }
  func.func @transform_2(%arg0: i32) -> (i32, i32) {
    %c0_i32 = arith.constant 0 : i32
    %c0_i32_0 = arith.constant 0 : i32
    %c0_i32_1 = arith.constant 0 : i32
    return %c0_i32, %c0_i32_0 : i32, i32
  }
  func.func @transform_3(%arg0: i32) -> (i32, i32) {
    %c0_i32 = arith.constant 0 : i32
    %c0_i32_0 = arith.constant 0 : i32
    return %arg0, %c0_i32 : i32, i32
  }
}

</mosaic_0001>

<llo_original>
// kernel: tile.8
$region0: #{tile.8}
  #allocation0 [shape = 's32[1]{0}', space=sflag, size = 0x4, scoped, tag = 'scoped memory for tile.8']
  %s0 = inlined_call_operand.vmem [shape: f32[16], index: 0, kind: input, shape index: {}]
  %s1 = inlined_call_operand.vmem [shape: f32[8,16], index: 1, kind: output, shape index: {}]
  // Predicated region
  $region2: #{tile.8} parent=0 // pred_check
    _
  $region3: #{tile.8} parent=0 // pred_check_branch
    %3 = sbr.rel (0) target = $region5
  $region4: #{tile.8} parent=0 // pred_region
    _
  $region5: #{tile.8} parent=0 // pred_fallthru
    _
  %v4 = vld [vmem:[%s0] ss:$0 sm:$0xff]
  %5 = vst [vmem:[%s1] sm:$0xff] %v4

// kernel: tile.9
$region0: #{tile.9}
  %s0 = inlined_call_operand.vmem [shape: f32[8,16], index: 0, kind: input, shape index: {}]
  %s1 = inlined_call_operand.vmem [shape: f32[1,128], index: 1, kind: output, shape index: {}]
  $region1: #{tile.9} parent=0
    #allocation0 [shape = 'u8[4096]{0}', space=vmem, size = 0x1000, scoped, tag = 'scoped mem for output reshape']
    %v2 = vld [vmem:[%s0] sm:$0x1]
    %vm3 = vcmask 130048
    %4 = vst.msk [vmem:[#allocation0] sm:$0x1] %vm3, %v2
    %s5 = scalar_lea.vmem %s0, 7
    %v6 = vld [vmem:[%s5] sm:$0x1]
    %7 = vrot.lane.b32.xlu0 %v6, 112
    %v8 = vpop.permute.xlu0 %7
    %vm9 = vcmask 1048448
    %10 = vst.msk [vmem:[#allocation0] sm:$0x1] %vm9, %v8
    %s11 = scalar_lea.vmem %s0, 6
    %v12 = vld [vmem:[%s11] sm:$0x1]
    %13 = vrot.lane.b32.xlu0 %v12, 96
    %v14 = vpop.permute.xlu0 %13
    %vm15 = vcmask 917248
    %16 = vst.msk [vmem:[#allocation0] sm:$0x1] %vm15, %v14
    %s17 = scalar_lea.vmem %s0, 5
    %v18 = vld [vmem:[%s17] sm:$0x1]
    %19 = vrot.lane.b32.xlu0 %v18, 80
    %v20 = vpop.permute.xlu0 %19
    %vm21 = vcmask 786048
    %22 = vst.msk [vmem:[#allocation0] sm:$0x1] %vm21, %v20
    %s23 = scalar_lea.vmem %s0, 4
    %v24 = vld [vmem:[%s23] sm:$0x1]
    %25 = vrot.lane.b32.xlu0 %v24, 64
    %v26 = vpop.permute.xlu0 %25
    %vm27 = vcmask 654848
    %28 = vst.msk [vmem:[#allocation0] sm:$0x1] %vm27, %v26
    %s29 = scalar_lea.vmem %s0, 3
    %v30 = vld [vmem:[%s29] sm:$0x1]
    %31 = vrot.lane.b32.xlu0 %v30, 48
    %v32 = vpop.permute.xlu0 %31
    %vm33 = vcmask 523648
    %34 = vst.msk [vmem:[#allocation0] sm:$0x1] %vm33, %v32
    %s35 = scalar_lea.vmem %s0, 2
    %v36 = vld [vmem:[%s35] sm:$0x1]
    %37 = vrot.lane.b32.xlu0 %v36, 32
    %v38 = vpop.permute.xlu0 %37
    %vm39 = vcmask 392448
    %40 = vst.msk [vmem:[#allocation0] sm:$0x1] %vm39, %v38
    %s41 = scalar_lea.vmem %s0, 1
    %v42 = vld [vmem:[%s41] sm:$0x1]
    %43 = vrot.lane.b32.xlu0 %v42, 16
    %v44 = vpop.permute.xlu0 %43
    %vm45 = vcmask 261248
    %46 = vst.msk [vmem:[#allocation0] sm:$0x1] %vm45, %v44
    %s48 = ssub.s32 2, 1
    %v49 = vld [vmem:[#allocation0] sm:%s48]
    %s51 = ssub.s32 2, 1
    %52 = vst [vmem:[%s1] sm:%s51] %v49

// kernel: model_forward.1
$region0: #{model_forward.1}
  #allocation0 [shape = 'u32[]', space=smem, size = 0x4, offset = 0x4, fixed_abs, tag = 'smem constant byte address 0x4 - core index']
  #allocation1 [shape = 'u32[72,128]{1,0:T(1,128)}', space=vmem, size = 0x9000, scoped, tag = 'internal scratch']
  %s0 = inlined_call_operand.vmem [shape: f32[1,256], index: 0, kind: input, shape index: {}]
  %s1 = inlined_call_operand.vmem [shape: f32[256,128], index: 1, kind: input, shape index: {}]
  %s2 = inlined_call_operand.vmem [shape: f32[1,128], index: 2, kind: input, shape index: {}]
  %s3 = inlined_call_operand.vmem [shape: f32[1,128], index: 3, kind: output, shape index: {}]
  %s4 = sld [smem:[#allocation0]]
  $region22: #{model_forward.1} parent=0
    _
  %s6 = ssub.s32 1, %s4
  %s7 = scalar_select 0, %s6, %s4
  // Predicated region
  $region2: #{model_forward.1} parent=0 // pred_check
    _
  $region3: #{model_forward.1} parent=0 // pred_check_branch
    %9 = sbr.rel (0) target = $region5
  $region4: #{model_forward.1} parent=0 // pred_region
    _
  $region5: #{model_forward.1} parent=0 // pred_fallthru
    _
  // Predicated region
  $region6: #{model_forward.1} parent=0 // pred_check
    _
  $region7: #{model_forward.1} parent=0 // pred_check_branch
    %11 = sbr.rel (0) target = $region9
  $region8: #{model_forward.1} parent=0 // pred_region
    _
  $region9: #{model_forward.1} parent=0 // pred_fallthru
    _
  // Predicated region
  $region10: #{model_forward.1} parent=0 // pred_check
    _
  $region11: #{model_forward.1} parent=0 // pred_check_branch
    %13 = sbr.rel (0) target = $region13
  $region12: #{model_forward.1} parent=0 // pred_region
    _
  $region13: #{model_forward.1} parent=0 // pred_fallthru
    _
  %v14 = vld [vmem:[%s0] sm:$0x3]
  %v15 = vld [vmem:[%s1] sm:$0xff]
  %v16 = vld [vmem:[%s1 + $0x8] sm:$0xff]
  %v17 = vld [vmem:[%s1 + $0x10] sm:$0xff]
  %v18 = vld [vmem:[%s1 + $0x18] sm:$0xff]
  %v19 = vld [vmem:[%s1 + $0x20] sm:$0xff]
  %v20 = vld [vmem:[%s1 + $0x28] sm:$0xff]
  %v21 = vld [vmem:[%s1 + $0x30] sm:$0xff]
  %v22 = vld [vmem:[%s1 + $0x38] sm:$0xff]
  %v23 = vld [vmem:[%s1 + $0x40] sm:$0xff]
  %v24 = vld [vmem:[%s1 + $0x48] sm:$0xff]
  %v25 = vld [vmem:[%s1 + $0x50] sm:$0xff]
  %v26 = vld [vmem:[%s1 + $0x58] sm:$0xff]
  %v27 = vld [vmem:[%s1 + $0x60] sm:$0xff]
  %v28 = vld [vmem:[%s1 + $0x68] sm:$0xff]
  %v29 = vld [vmem:[%s1 + $0x70] sm:$0xff]
  %v30 = vld [vmem:[%s1 + $0x78] sm:$0xff]
  %v31 = vld [vmem:[%s1 + $0x80] sm:$0xff]
  %v32 = vld [vmem:[%s1 + $0x88] sm:$0xff]
  %v33 = vld [vmem:[%s1 + $0x90] sm:$0xff]
  %v34 = vld [vmem:[%s1 + $0x98] sm:$0xff]
  %v35 = vld [vmem:[%s1 + $0xa0] sm:$0xff]
  %v36 = vld [vmem:[%s1 + $0xa8] sm:$0xff]
  %v37 = vld [vmem:[%s1 + $0xb0] sm:$0xff]
  %v38 = vld [vmem:[%s1 + $0xb8] sm:$0xff]
  %v39 = vld [vmem:[%s1 + $0xc0] sm:$0xff]
  %v40 = vld [vmem:[%s1 + $0xc8] sm:$0xff]
  %v41 = vld [vmem:[%s1 + $0xd0] sm:$0xff]
  %v42 = vld [vmem:[%s1 + $0xd8] sm:$0xff]
  %v43 = vld [vmem:[%s1 + $0xe0] sm:$0xff]
  %v44 = vld [vmem:[%s1 + $0xe8] sm:$0xff]
  %v45 = vld [vmem:[%s1 + $0xf0] sm:$0xff]
  %v46 = vld [vmem:[%s1 + $0xf8] sm:$0xff]
  %v47 = vld [vmem:[%s2] sm:$0x1]
  %v49 = vperm.slane %v14, 0
  %v50 = vperm.slane %v14, 1
  %v53 = vand.u32 %v30, 4294901760
  %54 = vmatpush.msra.mxu0 %v53
  %v55 = vand.u32 %v29, 4294901760
  %56 = vmatpush.msra.mxu0 %v55
  %v57 = vand.u32 %v28, 4294901760
  %58 = vmatpush.msra.mxu0 %v57
  %v59 = vand.u32 %v27, 4294901760
  %60 = vmatpush.msra.mxu0 %v59
  %v61 = vand.u32 %v26, 4294901760
  %62 = vmatpush.msra.mxu0 %v61
  %v63 = vand.u32 %v25, 4294901760
  %64 = vmatpush.msra.mxu0 %v63
  %v65 = vand.u32 %v24, 4294901760
  %66 = vmatpush.msra.mxu0 %v65
  %v67 = vand.u32 %v23, 4294901760
  %68 = vmatpush.msra.mxu0 %v67
  %v69 = vand.u32 %v22, 4294901760
  %70 = vmatpush.msra.mxu0 %v69
  %v71 = vand.u32 %v21, 4294901760
  %72 = vmatpush.msra.mxu0 %v71
  %v73 = vand.u32 %v20, 4294901760
  %74 = vmatpush.msra.mxu0 %v73
  %v75 = vand.u32 %v19, 4294901760
  %76 = vmatpush.msra.mxu0 %v75
  %v77 = vand.u32 %v18, 4294901760
  %78 = vmatpush.msra.mxu0 %v77
  %v79 = vand.u32 %v17, 4294901760
  %80 = vmatpush.msra.mxu0 %v79
  %v81 = vand.u32 %v16, 4294901760
  %82 = vmatpush.msra.mxu0 %v81
  %v83 = vand.u32 %v15, 4294901760
  %84 = vmatpush.msra.mxu0 %v83
  %v85 = vand.u32 %v49, 4294901760
  %v86 = vsub.f32 %v49, %v85
  %v87 = vand.u32 %v86, 4294901760
  %v88 = vsub.f32 %v86, %v87
  %v89 = vand.u32 %v88, 4294901760
  %90 = vmatmul.f32.gmra.mxu0 %v89
  %v91 = vpop.f32.mrf.mxu0
  %v92 = vadd.f32 %v47, %v91
  %93 = vdwg.mxu0
  %v94 = vand.u32 %v30, 4294901760
  %v95 = vsub.f32 %v30, %v94
  %v96 = vand.u32 %v95, 4294901760
  %v97 = vsub.f32 %v95, %v96
  %v98 = vand.u32 %v97, 4294901760
  %99 = vmatpush.msra.mxu0 %v98
  %v100 = vand.u32 %v29, 4294901760
  %v101 = vsub.f32 %v29, %v100
  %v102 = vand.u32 %v101, 4294901760
  %v103 = vsub.f32 %v101, %v102
  %v104 = vand.u32 %v103, 4294901760
  %105 = vmatpush.msra.mxu0 %v104
  %v106 = vand.u32 %v28, 4294901760
  %v107 = vsub.f32 %v28, %v106
  %v108 = vand.u32 %v107, 4294901760
  %v109 = vsub.f32 %v107, %v108
  %v110 = vand.u32 %v109, 4294901760
  %111 = vmatpush.msra.mxu0 %v110
  %v112 = vand.u32 %v27, 4294901760
  %v113 = vsub.f32 %v27, %v112
  %v114 = vand.u32 %v113, 4294901760
  %v115 = vsub.f32 %v113, %v114
  %v116 = vand.u32 %v115, 4294901760
  %117 = vmatpush.msra.mxu0 %v116
  %v118 = vand.u32 %v26, 4294901760
  %v119 = vsub.f32 %v26, %v118
  %v120 = vand.u32 %v119, 4294901760
  %v121 = vsub.f32 %v119, %v120
  %v122 = vand.u32 %v121, 4294901760
  %123 = vmatpush.msra.mxu0 %v122
  %v124 = vand.u32 %v25, 4294901760
  %v125 = vsub.f32 %v25, %v124
  %v126 = vand.u32 %v125, 4294901760
  %v127 = vsub.f32 %v125, %v126
  %v128 = vand.u32 %v127, 4294901760
  %129 = vmatpush.msra.mxu0 %v128
  %v130 = vand.u32 %v24, 4294901760
  %v131 = vsub.f32 %v24, %v130
  %v132 = vand.u32 %v131, 4294901760
  %v133 = vsub.f32 %v131, %v132
  %v134 = vand.u32 %v133, 4294901760
  %135 = vmatpush.msra.mxu0 %v134
  %v136 = vand.u32 %v23, 4294901760
  %v137 = vsub.f32 %v23, %v136
  %v138 = vand.u32 %v137, 4294901760
  %v139 = vsub.f32 %v137, %v138
  %v140 = vand.u32 %v139, 4294901760
  %141 = vmatpush.msra.mxu0 %v140
  %v142 = vand.u32 %v22, 4294901760
  %v143 = vsub.f32 %v22, %v142
  %v144 = vand.u32 %v143, 4294901760
  %v145 = vsub.f32 %v143, %v144
  %v146 = vand.u32 %v145, 4294901760
  %147 = vmatpush.msra.mxu0 %v146
  %v148 = vand.u32 %v21, 4294901760
  %v149 = vsub.f32 %v21, %v148
  %v150 = vand.u32 %v149, 4294901760
  %v151 = vsub.f32 %v149, %v150
  %v152 = vand.u32 %v151, 4294901760
  %153 = vmatpush.msra.mxu0 %v152
  %v154 = vand.u32 %v20, 4294901760
  %v155 = vsub.f32 %v20, %v154
  %v156 = vand.u32 %v155, 4294901760
  %v157 = vsub.f32 %v155, %v156
  %v158 = vand.u32 %v157, 4294901760
  %159 = vmatpush.msra.mxu0 %v158
  %v160 = vand.u32 %v19, 4294901760
  %v161 = vsub.f32 %v19, %v160
  %v162 = vand.u32 %v161, 4294901760
  %v163 = vsub.f32 %v161, %v162
  %v164 = vand.u32 %v163, 4294901760
  %165 = vmatpush.msra.mxu0 %v164
  %v166 = vand.u32 %v18, 4294901760
  %v167 = vsub.f32 %v18, %v166
  %v168 = vand.u32 %v167, 4294901760
  %v169 = vsub.f32 %v167, %v168
  %v170 = vand.u32 %v169, 4294901760
  %171 = vmatpush.msra.mxu0 %v170
  %v172 = vand.u32 %v17, 4294901760
  %v173 = vsub.f32 %v17, %v172
  %v174 = vand.u32 %v173, 4294901760
  %v175 = vsub.f32 %v173, %v174
  %v176 = vand.u32 %v175, 4294901760
  %177 = vmatpush.msra.mxu0 %v176
  %v178 = vand.u32 %v16, 4294901760
  %v179 = vsub.f32 %v16, %v178
  %v180 = vand.u32 %v179, 4294901760
  %v181 = vsub.f32 %v179, %v180
  %v182 = vand.u32 %v181, 4294901760
  %183 = vmatpush.msra.mxu0 %v182
  %v184 = vand.u32 %v15, 4294901760
  %v185 = vsub.f32 %v15, %v184
  %v186 = vand.u32 %v185, 4294901760
  %v187 = vsub.f32 %v185, %v186
  %v188 = vand.u32 %v187, 4294901760
  %189 = vmatpush.msra.mxu0 %v188
  %v190 = vand.u32 %v49, 4294901760
  %191 = vmatmul.f32.gmra.mxu0 %v190
  %v192 = vpop.f32.mrf.mxu0
  %v193 = vadd.f32 %v92, %v192
  %194 = vdwg.mxu0
  %v195 = vand.u32 %v30, 4294901760
  %v196 = vsub.f32 %v30, %v195
  %197 = vmatpush.msra.mxu0 %v196
  %v198 = vand.u32 %v29, 4294901760
  %v199 = vsub.f32 %v29, %v198
  %200 = vmatpush.msra.mxu0 %v199
  %v201 = vand.u32 %v28, 4294901760
  %v202 = vsub.f32 %v28, %v201
  %203 = vmatpush.msra.mxu0 %v202
  %v204 = vand.u32 %v27, 4294901760
  %v205 = vsub.f32 %v27, %v204
  %206 = vmatpush.msra.mxu0 %v205
  %v207 = vand.u32 %v26, 4294901760
  %v208 = vsub.f32 %v26, %v207
  %209 = vmatpush.msra.mxu0 %v208
  %v210 = vand.u32 %v25, 4294901760
  %v211 = vsub.f32 %v25, %v210
  %212 = vmatpush.msra.mxu0 %v211
  %v213 = vand.u32 %v24, 4294901760
  %v214 = vsub.f32 %v24, %v213
  %215 = vmatpush.msra.mxu0 %v214
  %v216 = vand.u32 %v23, 4294901760
  %v217 = vsub.f32 %v23, %v216
  %218 = vmatpush.msra.mxu0 %v217
  %v219 = vand.u32 %v22, 4294901760
  %v220 = vsub.f32 %v22, %v219
  %221 = vmatpush.msra.mxu0 %v220
  %v222 = vand.u32 %v21, 4294901760
  %v223 = vsub.f32 %v21, %v222
  %224 = vmatpush.msra.mxu0 %v223
  %v225 = vand.u32 %v20, 4294901760
  %v226 = vsub.f32 %v20, %v225
  %227 = vmatpush.msra.mxu0 %v226
  %v228 = vand.u32 %v19, 4294901760
  %v229 = vsub.f32 %v19, %v228
  %230 = vmatpush.msra.mxu0 %v229
  %v231 = vand.u32 %v18, 4294901760
  %v232 = vsub.f32 %v18, %v231
  %233 = vmatpush.msra.mxu0 %v232
  %v234 = vand.u32 %v17, 4294901760
  %v235 = vsub.f32 %v17, %v234
  %236 = vmatpush.msra.mxu0 %v235
  %v237 = vand.u32 %v16, 4294901760
  %v238 = vsub.f32 %v16, %v237
  %239 = vmatpush.msra.mxu0 %v238
  %v240 = vand.u32 %v15, 4294901760
  %v241 = vsub.f32 %v15, %v240
  %242 = vmatpush.msra.mxu0 %v241
  %v243 = vand.u32 %v49, 4294901760
  %v244 = vsub.f32 %v49, %v243
  %245 = vmatmul.f32.gmra.mxu0 %v244
  %v246 = vpop.f32.mrf.mxu0
  %v247 = vadd.f32 %v193, %v246
  %248 = vdwg.mxu0
  %v249 = vand.u32 %v30, 4294901760
  %250 = vmatpush.msra.mxu0 %v249
  %v251 = vand.u32 %v29, 4294901760
  %252 = vmatpush.msra.mxu0 %v251
  %v253 = vand.u32 %v28, 4294901760
  %254 = vmatpush.msra.mxu0 %v253
  %v255 = vand.u32 %v27, 4294901760
  %256 = vmatpush.msra.mxu0 %v255
  %v257 = vand.u32 %v26, 4294901760
  %258 = vmatpush.msra.mxu0 %v257
  %v259 = vand.u32 %v25, 4294901760
  %260 = vmatpush.msra.mxu0 %v259
  %v261 = vand.u32 %v24, 4294901760
  %262 = vmatpush.msra.mxu0 %v261
  %v263 = vand.u32 %v23, 4294901760
  %264 = vmatpush.msra.mxu0 %v263
  %v265 = vand.u32 %v22, 4294901760
  %266 = vmatpush.msra.mxu0 %v265
  %v267 = vand.u32 %v21, 4294901760
  %268 = vmatpush.msra.mxu0 %v267
  %v269 = vand.u32 %v20, 4294901760
  %270 = vmatpush.msra.mxu0 %v269
  %v271 = vand.u32 %v19, 4294901760
  %272 = vmatpush.msra.mxu0 %v271
  %v273 = vand.u32 %v18, 4294901760
  %274 = vmatpush.msra.mxu0 %v273
  %v275 = vand.u32 %v17, 4294901760
  %276 = vmatpush.msra.mxu0 %v275
  %v277 = vand.u32 %v16, 4294901760
  %278 = vmatpush.msra.mxu0 %v277
  %v279 = vand.u32 %v15, 4294901760
  %280 = vmatpush.msra.mxu0 %v279
  %v281 = vand.u32 %v49, 4294901760
  %v282 = vsub.f32 %v49, %v281
  %v283 = vand.u32 %v282, 4294901760
  %284 = vmatmul.f32.gmra.mxu0 %v283
  %v285 = vpop.f32.mrf.mxu0
  %v286 = vadd.f32 %v247, %v285
  %287 = vdwg.mxu0
  %v288 = vand.u32 %v30, 4294901760
  %v289 = vsub.f32 %v30, %v288
  %v290 = vand.u32 %v289, 4294901760
  %291 = vmatpush.msra.mxu0 %v290
  %v292 = vand.u32 %v29, 4294901760
  %v293 = vsub.f32 %v29, %v292
  %v294 = vand.u32 %v293, 4294901760
  %295 = vmatpush.msra.mxu0 %v294
  %v296 = vand.u32 %v28, 4294901760
  %v297 = vsub.f32 %v28, %v296
  %v298 = vand.u32 %v297, 4294901760
  %299 = vmatpush.msra.mxu0 %v298
  %v300 = vand.u32 %v27, 4294901760
  %v301 = vsub.f32 %v27, %v300
  %v302 = vand.u32 %v301, 4294901760
  %303 = vmatpush.msra.mxu0 %v302
  %v304 = vand.u32 %v26, 4294901760
  %v305 = vsub.f32 %v26, %v304
  %v306 = vand.u32 %v305, 4294901760
  %307 = vmatpush.msra.mxu0 %v306
  %v308 = vand.u32 %v25, 4294901760
  %v309 = vsub.f32 %v25, %v308
  %v310 = vand.u32 %v309, 4294901760
  %311 = vmatpush.msra.mxu0 %v310
  %v312 = vand.u32 %v24, 4294901760
  %v313 = vsub.f32 %v24, %v312
  %v314 = vand.u32 %v313, 4294901760
  %315 = vmatpush.msra.mxu0 %v314
  %v316 = vand.u32 %v23, 4294901760
  %v317 = vsub.f32 %v23, %v316
  %v318 = vand.u32 %v317, 4294901760
  %319 = vmatpush.msra.mxu0 %v318
  %v320 = vand.u32 %v22, 4294901760
  %v321 = vsub.f32 %v22, %v320
  %v322 = vand.u32 %v321, 4294901760
  %323 = vmatpush.msra.mxu0 %v322
  %v324 = vand.u32 %v21, 4294901760
  %v325 = vsub.f32 %v21, %v324
  %v326 = vand.u32 %v325, 4294901760
  %327 = vmatpush.msra.mxu0 %v326
  %v328 = vand.u32 %v20, 4294901760
  %v329 = vsub.f32 %v20, %v328
  %v330 = vand.u32 %v329, 4294901760
  %331 = vmatpush.msra.mxu0 %v330
  %v332 = vand.u32 %v19, 4294901760
  %v333 = vsub.f32 %v19, %v332
  %v334 = vand.u32 %v333, 4294901760
  %335 = vmatpush.msra.mxu0 %v334
  %v336 = vand.u32 %v18, 4294901760
  %v337 = vsub.f32 %v18, %v336
  %v338 = vand.u32 %v337, 4294901760
  %339 = vmatpush.msra.mxu0 %v338
  %v340 = vand.u32 %v17, 4294901760
  %v341 = vsub.f32 %v17, %v340
  %v342 = vand.u32 %v341, 4294901760
  %343 = vmatpush.msra.mxu0 %v342
  %v344 = vand.u32 %v16, 4294901760
  %v345 = vsub.f32 %v16, %v344
  %v346 = vand.u32 %v345, 4294901760
  %347 = vmatpush.msra.mxu0 %v346
  %v348 = vand.u32 %v15, 4294901760
  %v349 = vsub.f32 %v15, %v348
  %v350 = vand.u32 %v349, 4294901760
  %351 = vmatpush.msra.mxu0 %v350
  %v352 = vand.u32 %v49, 4294901760
  %353 = vmatmul.f32.gmra.mxu0 %v352
  %v354 = vpop.f32.mrf.mxu0
  %v355 = vadd.f32 %v286, %v354
  %356 = vdwg.mxu0
  %v357 = vand.u32 %v30, 4294901760
  %358 = vmatpush.msra.mxu0 %v357
  %v359 = vand.u32 %v29, 4294901760
  %360 = vmatpush.msra.mxu0 %v359
  %v361 = vand.u32 %v28, 4294901760
  %362 = vmatpush.msra.mxu0 %v361
  %v363 = vand.u32 %v27, 4294901760
  %364 = vmatpush.msra.mxu0 %v363
  %v365 = vand.u32 %v26, 4294901760
  %366 = vmatpush.msra.mxu0 %v365
  %v367 = vand.u32 %v25, 4294901760
  %368 = vmatpush.msra.mxu0 %v367
  %v369 = vand.u32 %v24, 4294901760
  %370 = vmatpush.msra.mxu0 %v369
  %v371 = vand.u32 %v23, 4294901760
  %372 = vmatpush.msra.mxu0 %v371
  %v373 = vand.u32 %v22, 4294901760
  %374 = vmatpush.msra.mxu0 %v373
  %v375 = vand.u32 %v21, 4294901760
  %376 = vmatpush.msra.mxu0 %v375
  %v377 = vand.u32 %v20, 4294901760
  %378 = vmatpush.msra.mxu0 %v377
  %v379 = vand.u32 %v19, 4294901760
  %380 = vmatpush.msra.mxu0 %v379
  %v381 = vand.u32 %v18, 4294901760
  %382 = vmatpush.msra.mxu0 %v381
  %v383 = vand.u32 %v17, 4294901760
  %384 = vmatpush.msra.mxu0 %v383
  %v385 = vand.u32 %v16, 4294901760
  %386 = vmatpush.msra.mxu0 %v385
  %v387 = vand.u32 %v15, 4294901760
  %388 = vmatpush.msra.mxu0 %v387
  %v389 = vand.u32 %v49, 4294901760
  %390 = vmatmul.f32.gmra.mxu0 %v389
  %v391 = vpop.f32.mrf.mxu0
  %v392 = vadd.f32 %v355, %v391
  %393 = vdwg.mxu0
  %v394 = vand.u32 %v46, 4294901760
  %395 = vmatpush.msra.mxu0 %v394
  %v396 = vand.u32 %v45, 4294901760
  %397 = vmatpush.msra.mxu0 %v396
  %v398 = vand.u32 %v44, 4294901760
  %399 = vmatpush.msra.mxu0 %v398
  %v400 = vand.u32 %v43, 4294901760
  %401 = vmatpush.msra.mxu0 %v400
  %v402 = vand.u32 %v42, 4294901760
  %403 = vmatpush.msra.mxu0 %v402
  %v404 = vand.u32 %v41, 4294901760
  %405 = vmatpush.msra.mxu0 %v404
  %v406 = vand.u32 %v40, 4294901760
  %407 = vmatpush.msra.mxu0 %v406
  %v408 = vand.u32 %v39, 4294901760
  %409 = vmatpush.msra.mxu0 %v408
  %v410 = vand.u32 %v38, 4294901760
  %411 = vmatpush.msra.mxu0 %v410
  %v412 = vand.u32 %v37, 4294901760
  %413 = vmatpush.msra.mxu0 %v412
  %v414 = vand.u32 %v36, 4294901760
  %415 = vmatpush.msra.mxu0 %v414
  %v416 = vand.u32 %v35, 4294901760
  %417 = vmatpush.msra.mxu0 %v416
  %v418 = vand.u32 %v34, 4294901760
  %419 = vmatpush.msra.mxu0 %v418
  %v420 = vand.u32 %v33, 4294901760
  %421 = vmatpush.msra.mxu0 %v420
  %v422 = vand.u32 %v32, 4294901760
  %423 = vmatpush.msra.mxu0 %v422
  %v424 = vand.u32 %v31, 4294901760
  %425 = vmatpush.msra.mxu0 %v424
  %v426 = vand.u32 %v50, 4294901760
  %v427 = vsub.f32 %v50, %v426
  %v428 = vand.u32 %v427, 4294901760
  %v429 = vsub.f32 %v427, %v428
  %v430 = vand.u32 %v429, 4294901760
  %431 = vmatmul.f32.gmra.mxu0 %v430
  %v432 = vpop.f32.mrf.mxu0
  %v433 = vadd.f32 %v392, %v432
  %434 = vdwg.mxu0
  %v435 = vand.u32 %v46, 4294901760
  %v436 = vsub.f32 %v46, %v435
  %v437 = vand.u32 %v436, 4294901760
  %v438 = vsub.f32 %v436, %v437
  %v439 = vand.u32 %v438, 4294901760
  %440 = vmatpush.msra.mxu0 %v439
  %v441 = vand.u32 %v45, 4294901760
  %v442 = vsub.f32 %v45, %v441
  %v443 = vand.u32 %v442, 4294901760
  %v444 = vsub.f32 %v442, %v443
  %v445 = vand.u32 %v444, 4294901760
  %446 = vmatpush.msra.mxu0 %v445
  %v447 = vand.u32 %v44, 4294901760
  %v448 = vsub.f32 %v44, %v447
  %v449 = vand.u32 %v448, 4294901760
  %v450 = vsub.f32 %v448, %v449
  %v451 = vand.u32 %v450, 4294901760
  %452 = vmatpush.msra.mxu0 %v451
  %v453 = vand.u32 %v43, 4294901760
  %v454 = vsub.f32 %v43, %v453
  %v455 = vand.u32 %v454, 4294901760
  %v456 = vsub.f32 %v454, %v455
  %v457 = vand.u32 %v456, 4294901760
  %458 = vmatpush.msra.mxu0 %v457
  %v459 = vand.u32 %v42, 4294901760
  %v460 = vsub.f32 %v42, %v459
  %v461 = vand.u32 %v460, 4294901760
  %v462 = vsub.f32 %v460, %v461
  %v463 = vand.u32 %v462, 4294901760
  %464 = vmatpush.msra.mxu0 %v463
  %v465 = vand.u32 %v41, 4294901760
  %v466 = vsub.f32 %v41, %v465
  %v467 = vand.u32 %v466, 4294901760
  %v468 = vsub.f32 %v466, %v467
  %v469 = vand.u32 %v468, 4294901760
  %470 = vmatpush.msra.mxu0 %v469
  %v471 = vand.u32 %v40, 4294901760
  %v472 = vsub.f32 %v40, %v471
  %v473 = vand.u32 %v472, 4294901760
  %v474 = vsub.f32 %v472, %v473
  %v475 = vand.u32 %v474, 4294901760
  %476 = vmatpush.msra.mxu0 %v475
  %v477 = vand.u32 %v39, 4294901760
  %v478 = vsub.f32 %v39, %v477
  %v479 = vand.u32 %v478, 4294901760
  %v480 = vsub.f32 %v478, %v479
  %v481 = vand.u32 %v480, 4294901760
  %482 = vmatpush.msra.mxu0 %v481
  %v483 = vand.u32 %v38, 4294901760
  %v484 = vsub.f32 %v38, %v483
  %v485 = vand.u32 %v484, 4294901760
  %v486 = vsub.f32 %v484, %v485
  %v487 = vand.u32 %v486, 4294901760
  %488 = vmatpush.msra.mxu0 %v487
  %v489 = vand.u32 %v37, 4294901760
  %v490 = vsub.f32 %v37, %v489
  %v491 = vand.u32 %v490, 4294901760
  %v492 = vsub.f32 %v490, %v491
  %v493 = vand.u32 %v492, 4294901760
  %494 = vmatpush.msra.mxu0 %v493
  %v495 = vand.u32 %v36, 4294901760
  %v496 = vsub.f32 %v36, %v495
  %v497 = vand.u32 %v496, 4294901760
  %v498 = vsub.f32 %v496, %v497
  %v499 = vand.u32 %v498, 4294901760
  %500 = vmatpush.msra.mxu0 %v499
  %v501 = vand.u32 %v35, 4294901760
  %v502 = vsub.f32 %v35, %v501
  %v503 = vand.u32 %v502, 4294901760
  %v504 = vsub.f32 %v502, %v503
  %v505 = vand.u32 %v504, 4294901760
  %506 = vmatpush.msra.mxu0 %v505
  %v507 = vand.u32 %v34, 4294901760
  %v508 = vsub.f32 %v34, %v507
  %v509 = vand.u32 %v508, 4294901760
  %v510 = vsub.f32 %v508, %v509
  %v511 = vand.u32 %v510, 4294901760
  %512 = vmatpush.msra.mxu0 %v511
  %v513 = vand.u32 %v33, 4294901760
  %v514 = vsub.f32 %v33, %v513
  %v515 = vand.u32 %v514, 4294901760
  %v516 = vsub.f32 %v514, %v515
  %v517 = vand.u32 %v516, 4294901760
  %518 = vmatpush.msra.mxu0 %v517
  %v519 = vand.u32 %v32, 4294901760
  %v520 = vsub.f32 %v32, %v519
  %v521 = vand.u32 %v520, 4294901760
  %v522 = vsub.f32 %v520, %v521
  %v523 = vand.u32 %v522, 4294901760
  %524 = vmatpush.msra.mxu0 %v523
  %v525 = vand.u32 %v31, 4294901760
  %v526 = vsub.f32 %v31, %v525
  %v527 = vand.u32 %v526, 4294901760
  %v528 = vsub.f32 %v526, %v527
  %v529 = vand.u32 %v528, 4294901760
  %530 = vmatpush.msra.mxu0 %v529
  %v531 = vand.u32 %v50, 4294901760
  %532 = vmatmul.f32.gmra.mxu0 %v531
  %v533 = vpop.f32.mrf.mxu0
  %v534 = vadd.f32 %v433, %v533
  %535 = vdwg.mxu0
  %v536 = vand.u32 %v46, 4294901760
  %v537 = vsub.f32 %v46, %v536
  %538 = vmatpush.msra.mxu0 %v537
  %v539 = vand.u32 %v45, 4294901760
  %v540 = vsub.f32 %v45, %v539
  %541 = vmatpush.msra.mxu0 %v540
  %v542 = vand.u32 %v44, 4294901760
  %v543 = vsub.f32 %v44, %v542
  %544 = vmatpush.msra.mxu0 %v543
  %v545 = vand.u32 %v43, 4294901760
  %v546 = vsub.f32 %v43, %v545
  %547 = vmatpush.msra.mxu0 %v546
  %v548 = vand.u32 %v42, 4294901760
  %v549 = vsub.f32 %v42, %v548
  %550 = vmatpush.msra.mxu0 %v549
  %v551 = vand.u32 %v41, 4294901760
  %v552 = vsub.f32 %v41, %v551
  %553 = vmatpush.msra.mxu0 %v552
  %v554 = vand.u32 %v40, 4294901760
  %v555 = vsub.f32 %v40, %v554
  %556 = vmatpush.msra.mxu0 %v555
  %v557 = vand.u32 %v39, 4294901760
  %v558 = vsub.f32 %v39, %v557
  %559 = vmatpush.msra.mxu0 %v558
  %v560 = vand.u32 %v38, 4294901760
  %v561 = vsub.f32 %v38, %v560
  %562 = vmatpush.msra.mxu0 %v561
  %v563 = vand.u32 %v37, 4294901760
  %v564 = vsub.f32 %v37, %v563
  %565 = vmatpush.msra.mxu0 %v564
  %v566 = vand.u32 %v36, 4294901760
  %v567 = vsub.f32 %v36, %v566
  %568 = vmatpush.msra.mxu0 %v567
  %v569 = vand.u32 %v35, 4294901760
  %v570 = vsub.f32 %v35, %v569
  %571 = vmatpush.msra.mxu0 %v570
  %v572 = vand.u32 %v34, 4294901760
  %v573 = vsub.f32 %v34, %v572
  %574 = vmatpush.msra.mxu0 %v573
  %v575 = vand.u32 %v33, 4294901760
  %v576 = vsub.f32 %v33, %v575
  %577 = vmatpush.msra.mxu0 %v576
  %v578 = vand.u32 %v32, 4294901760
  %v579 = vsub.f32 %v32, %v578
  %580 = vmatpush.msra.mxu0 %v579
  %v581 = vand.u32 %v31, 4294901760
  %v582 = vsub.f32 %v31, %v581
  %583 = vmatpush.msra.mxu0 %v582
  %v584 = vand.u32 %v50, 4294901760
  %v585 = vsub.f32 %v50, %v584
  %586 = vmatmul.f32.gmra.mxu0 %v585
  %v587 = vpop.f32.mrf.mxu0
  %v588 = vadd.f32 %v534, %v587
  %589 = vdwg.mxu0
  %v590 = vand.u32 %v46, 4294901760
  %591 = vmatpush.msra.mxu0 %v590
  %v592 = vand.u32 %v45, 4294901760
  %593 = vmatpush.msra.mxu0 %v592
  %v594 = vand.u32 %v44, 4294901760
  %595 = vmatpush.msra.mxu0 %v594
  %v596 = vand.u32 %v43, 4294901760
  %597 = vmatpush.msra.mxu0 %v596
  %v598 = vand.u32 %v42, 4294901760
  %599 = vmatpush.msra.mxu0 %v598
  %v600 = vand.u32 %v41, 4294901760
  %601 = vmatpush.msra.mxu0 %v600
  %v602 = vand.u32 %v40, 4294901760
  %603 = vmatpush.msra.mxu0 %v602
  %v604 = vand.u32 %v39, 4294901760
  %605 = vmatpush.msra.mxu0 %v604
  %v606 = vand.u32 %v38, 4294901760
  %607 = vmatpush.msra.mxu0 %v606
  %v608 = vand.u32 %v37, 4294901760
  %609 = vmatpush.msra.mxu0 %v608
  %v610 = vand.u32 %v36, 4294901760
  %611 = vmatpush.msra.mxu0 %v610
  %v612 = vand.u32 %v35, 4294901760
  %613 = vmatpush.msra.mxu0 %v612
  %v614 = vand.u32 %v34, 4294901760
  %615 = vmatpush.msra.mxu0 %v614
  %v616 = vand.u32 %v33, 4294901760
  %617 = vmatpush.msra.mxu0 %v616
  %v618 = vand.u32 %v32, 4294901760
  %619 = vmatpush.msra.mxu0 %v618
  %v620 = vand.u32 %v31, 4294901760
  %621 = vmatpush.msra.mxu0 %v620
  %v622 = vand.u32 %v50, 4294901760
  %v623 = vsub.f32 %v50, %v622
  %v624 = vand.u32 %v623, 4294901760
  %625 = vmatmul.f32.gmra.mxu0 %v624
  %v626 = vpop.f32.mrf.mxu0
  %v627 = vadd.f32 %v588, %v626
  %628 = vdwg.mxu0
  %v629 = vand.u32 %v46, 4294901760
  %v630 = vsub.f32 %v46, %v629
  %v631 = vand.u32 %v630, 4294901760
  %632 = vmatpush.msra.mxu0 %v631
  %v633 = vand.u32 %v45, 4294901760
  %v634 = vsub.f32 %v45, %v633
  %v635 = vand.u32 %v634, 4294901760
  %636 = vmatpush.msra.mxu0 %v635
  %v637 = vand.u32 %v44, 4294901760
  %v638 = vsub.f32 %v44, %v637
  %v639 = vand.u32 %v638, 4294901760
  %640 = vmatpush.msra.mxu0 %v639
  %v641 = vand.u32 %v43, 4294901760
  %v642 = vsub.f32 %v43, %v641
  %v643 = vand.u32 %v642, 4294901760
  %644 = vmatpush.msra.mxu0 %v643
  %v645 = vand.u32 %v42, 4294901760
  %v646 = vsub.f32 %v42, %v645
  %v647 = vand.u32 %v646, 4294901760
  %648 = vmatpush.msra.mxu0 %v647
  %v649 = vand.u32 %v41, 4294901760
  %v650 = vsub.f32 %v41, %v649
  %v651 = vand.u32 %v650, 4294901760
  %652 = vmatpush.msra.mxu0 %v651
  %v653 = vand.u32 %v40, 4294901760
  %v654 = vsub.f32 %v40, %v653
  %v655 = vand.u32 %v654, 4294901760
  %656 = vmatpush.msra.mxu0 %v655
  %v657 = vand.u32 %v39, 4294901760
  %v658 = vsub.f32 %v39, %v657
  %v659 = vand.u32 %v658, 4294901760
  %660 = vmatpush.msra.mxu0 %v659
  %v661 = vand.u32 %v38, 4294901760
  %v662 = vsub.f32 %v38, %v661
  %v663 = vand.u32 %v662, 4294901760
  %664 = vmatpush.msra.mxu0 %v663
  %v665 = vand.u32 %v37, 4294901760
  %v666 = vsub.f32 %v37, %v665
  %v667 = vand.u32 %v666, 4294901760
  %668 = vmatpush.msra.mxu0 %v667
  %v669 = vand.u32 %v36, 4294901760
  %v670 = vsub.f32 %v36, %v669
  %v671 = vand.u32 %v670, 4294901760
  %672 = vmatpush.msra.mxu0 %v671
  %v673 = vand.u32 %v35, 4294901760
  %v674 = vsub.f32 %v35, %v673
  %v675 = vand.u32 %v674, 4294901760
  %676 = vmatpush.msra.mxu0 %v675
  %v677 = vand.u32 %v34, 4294901760
  %v678 = vsub.f32 %v34, %v677
  %v679 = vand.u32 %v678, 4294901760
  %680 = vmatpush.msra.mxu0 %v679
  %v681 = vand.u32 %v33, 4294901760
  %v682 = vsub.f32 %v33, %v681
  %v683 = vand.u32 %v682, 4294901760
  %684 = vmatpush.msra.mxu0 %v683
  %v685 = vand.u32 %v32, 4294901760
  %v686 = vsub.f32 %v32, %v685
  %v687 = vand.u32 %v686, 4294901760
  %688 = vmatpush.msra.mxu0 %v687
  %v689 = vand.u32 %v31, 4294901760
  %v690 = vsub.f32 %v31, %v689
  %v691 = vand.u32 %v690, 4294901760
  %692 = vmatpush.msra.mxu0 %v691
  %v693 = vand.u32 %v50, 4294901760
  %694 = vmatmul.f32.gmra.mxu0 %v693
  %v695 = vpop.f32.mrf.mxu0
  %v696 = vadd.f32 %v627, %v695
  %697 = vdwg.mxu0
  %v698 = vand.u32 %v46, 4294901760
  %699 = vmatpush.msra.mxu0 %v698
  %v700 = vand.u32 %v45, 4294901760
  %701 = vmatpush.msra.mxu0 %v700
  %v702 = vand.u32 %v44, 4294901760
  %703 = vmatpush.msra.mxu0 %v702
  %v704 = vand.u32 %v43, 4294901760
  %705 = vmatpush.msra.mxu0 %v704
  %v706 = vand.u32 %v42, 4294901760
  %707 = vmatpush.msra.mxu0 %v706
  %v708 = vand.u32 %v41, 4294901760
  %709 = vmatpush.msra.mxu0 %v708
  %v710 = vand.u32 %v40, 4294901760
  %711 = vmatpush.msra.mxu0 %v710
  %v712 = vand.u32 %v39, 4294901760
  %713 = vmatpush.msra.mxu0 %v712
  %v714 = vand.u32 %v38, 4294901760
  %715 = vmatpush.msra.mxu0 %v714
  %v716 = vand.u32 %v37, 4294901760
  %717 = vmatpush.msra.mxu0 %v716
  %v718 = vand.u32 %v36, 4294901760
  %719 = vmatpush.msra.mxu0 %v718
  %v720 = vand.u32 %v35, 4294901760
  %721 = vmatpush.msra.mxu0 %v720
  %v722 = vand.u32 %v34, 4294901760
  %723 = vmatpush.msra.mxu0 %v722
  %v724 = vand.u32 %v33, 4294901760
  %725 = vmatpush.msra.mxu0 %v724
  %v726 = vand.u32 %v32, 4294901760
  %727 = vmatpush.msra.mxu0 %v726
  %v728 = vand.u32 %v31, 4294901760
  %729 = vmatpush.msra.mxu0 %v728
  %v730 = vand.u32 %v50, 4294901760
  %731 = vmatmul.f32.gmra.mxu0 %v730
  %v732 = vpop.f32.mrf.mxu0
  %v733 = vadd.f32 %v696, %v732
  %734 = vdwg.mxu0
  %v735 = vxor.u32 %v733, 2147483648
  %v736 = vmul.f32 %v735, 1.442695
  %v737 = vpow.pop %v736
  %v738 = vadd.f32 %v737, 1.0
  %v739 = vrcp.pop %v738
  %v740 = vmul.f32 %v738, %v739
  %v741 = vsub.f32 1.0, %v740
  %v742 = vmul.f32 %v739, %v741
  %v743 = vadd.f32 %v739, %v742
  %vm744 = vweird.f32 %v738
  %vm745 = vweird.f32 %v739
  %vm746 = vmor %vm744, %vm745
  %v747 = vsel %vm746, %v739, %v743
  %v748 = vand.u32 2147483647, %v738
  %vm749 = vcmp.eq.f32.partialorder %v748, 8.507059e+37
  %v750 = vand.u32 %v738, 2147483648
  %v751 = vor.u32 1.1754944e-38, %v750
  %v752 = vsel %vm749, %v751, %v747
  %v753 = vmul.f32 1.0, %v752
  %754 = vst [vmem:[%s3] sm:$0x1] %v753
  // Predicated region
  $region14: #{model_forward.1} parent=0 // pred_check
    _
  $region15: #{model_forward.1} parent=0 // pred_check_branch
    %756 = sbr.rel (0) target = $region17
  $region16: #{model_forward.1} parent=0 // pred_region
    _
  $region17: #{model_forward.1} parent=0 // pred_fallthru
    _
  // Predicated region
  $region18: #{model_forward.1} parent=0 // pred_check
    _
  $region19: #{model_forward.1} parent=0 // pred_check_branch
    %758 = sbr.rel (0) target = $region21
  $region20: #{model_forward.1} parent=0 // pred_region
    _
  $region21: #{model_forward.1} parent=0 // pred_fallthru
    _

</llo_original>
